<compile_context>
chip_gen: v7x
topology: tpu7x:2x2x1
jax: 0.10.0
libtpu: 0.0.40
codegen_flags: <defaults>
</compile_context>

<pallas_src>
import functools
import math

import jax
import jax.numpy as jnp
from jax.experimental import pallas as pl
from jax.experimental.pallas import tpu as pltpu


def _sinusoidal_kernel(t_ref, out_ref, *, neg_log_scale, half_pi):
    """out[b, j] = sin(t[b] * freq[j >> 1] + (j & 1) * pi/2)."""
    t = t_ref[...]                                            # [B, 1] f32
    dim = out_ref.shape[-1]
    # Column index along the lane (fast) axis; computed once at [1, dim].
    col = jax.lax.broadcasted_iota(jnp.int32, (1, dim), 1)    # [1, dim]
    pair = (col >> 1).astype(jnp.float32)                     # frequency index j // 2
    freq_row = jnp.exp(pair * neg_log_scale)                  # freq_full[j] = freq[j>>1]
    phase_row = (col & 1).astype(jnp.float32) * half_pi       # 0, pi/2, 0, pi/2, ...
    # One broadcast multiply-add on the VPU + one EUP sin over the full tile.
    out_ref[...] = jnp.sin(t * freq_row + phase_row)


def sinusoidal_position_embeddings(time: jax.Array, dim: int) -> jax.Array:
    """time: [B] (any float/int dtype) -> [B, dim] float32 embeddings."""
    assert dim % 2 == 0, "dim must be even"
    # dim == 2 divides by zero in the PyTorch module (dim//2 - 1 == 0); reject it.
    assert dim >= 4, "dim must be >= 4"
    half = dim // 2
    b = time.shape[0]
    t2d = time.astype(jnp.float32).reshape(b, 1)              # [B, 1]

    kernel = functools.partial(
        _sinusoidal_kernel,
        neg_log_scale=-math.log(10000.0) / float(half - 1),   # compile-time scalar
        half_pi=math.pi / 2.0,
    )
    return pl.pallas_call(
        kernel,
        out_shape=jax.ShapeDtypeStruct((b, dim), jnp.float32),
        grid=(1,),
        in_specs=[pl.BlockSpec((b, 1), lambda i: (0, 0))],
        out_specs=pl.BlockSpec((b, dim), lambda i: (0, 0)),
        compiler_params=pltpu.CompilerParams(
            dimension_semantics=("arbitrary",)),
    )(t2d)


def _reference(time: jax.Array, dim: int) -> jax.Array:
    """Pure-JAX reference matching the PyTorch forward bit-for-bit in structure."""
    half = dim // 2
    exponent = jnp.arange(half, dtype=jnp.float32) / float(half - 1)
    freq = 1.0 / (10000.0 ** exponent)
    t_freq = time.astype(jnp.float32)[:, None] * freq[None, :]   # [B, half]
    emb = jnp.zeros((time.shape[0], dim), dtype=jnp.float32)
    emb = emb.at[:, 0::2].set(jnp.sin(t_freq))
    emb = emb.at[:, 1::2].set(jnp.cos(t_freq))
    return emb


if __name__ == "__main__":
    key = jax.random.PRNGKey(0)
    batch = 8
    dim = 256  # realistic time-embedding width; multiple of 128 -> lane-dense stores
    # Diffusion timesteps: deterministic floats in [0, 1000)
    time = jax.random.uniform(key, (batch,), dtype=jnp.float32,
                              minval=0.0, maxval=1000.0)

    out = jax.block_until_ready(sinusoidal_position_embeddings(time, dim))
    ref = _reference(time, dim)

    assert out.shape == (batch, dim), out.shape
    assert out.dtype == jnp.float32, out.dtype
    # Tolerance note: the phase trick (sin(x + pi/2) vs cos(x)) and the
    # exp-reconstructed frequency table each differ from the literal PyTorch
    # formula by O(ulp(x)) ~ 1e-4 absolute at float32 timesteps up to 1000.
    max_err = float(jnp.max(jnp.abs(out - ref)))
    assert jnp.allclose(out, ref, atol=5e-4, rtol=5e-4), max_err

    print("KERNEL_OK")
</pallas_src>

<mosaic_0001>
module attributes {stable_mosaic.version = 11 : i64} {
  func.func @_sinusoidal_kernel(%arg0: i32, %arg1: memref<8x1xf32, #tpu.memory_space<vmem>>, %arg2: memref<8x256xf32, #tpu.memory_space<vmem>>) attributes {dimension_semantics = [#tpu.dimension_semantics<arbitrary>], iteration_bounds = array<i64: 1>, scalar_prefetch = 0 : i64, scratch_operands = 0 : i64, tpu.core_type = #tpu.core_type<tc>, window_params = [{pipeline_mode = #tpu.pipeline_mode<synchronous>, transform_indices = @transform_0, window_bounds = array<i64: 8, 1>}, {pipeline_mode = #tpu.pipeline_mode<synchronous>, transform_indices = @transform_1, window_bounds = array<i64: 8, 256>}]} {
    %c0 = arith.constant 0 : index
    %c0_0 = arith.constant 0 : index
    %0 = vector.load %arg1[%c0, %c0_0] : memref<8x1xf32, #tpu.memory_space<vmem>>, vector<8x1xf32>
    %1 = tpu.iota {dimensions = array<i32: 1>} : vector<1x256xi32>
    %c1_i32 = arith.constant 1 : i32
    %2 = vector.broadcast %c1_i32 : i32 to vector<1x256xi32>
    %3 = arith.shrsi %1, %2 : vector<1x256xi32>
    %4 = arith.sitofp %3 : vector<1x256xi32> to vector<1x256xf32>
    %cst = arith.constant -0.0725223646 : f32
    %5 = vector.broadcast %cst : f32 to vector<1x256xf32>
    %6 = arith.mulf %4, %5 : vector<1x256xf32>
    %7 = math.exp %6 : vector<1x256xf32>
    %c1_i32_1 = arith.constant 1 : i32
    %8 = vector.broadcast %c1_i32_1 : i32 to vector<1x256xi32>
    %9 = arith.andi %1, %8 : vector<1x256xi32>
    %10 = arith.sitofp %9 : vector<1x256xi32> to vector<1x256xf32>
    %cst_2 = arith.constant 1.57079637 : f32
    %11 = vector.broadcast %cst_2 : f32 to vector<1x256xf32>
    %12 = arith.mulf %10, %11 : vector<1x256xf32>
    %13 = vector.broadcast %0 : vector<8x1xf32> to vector<8x256xf32>
    %14 = vector.broadcast %7 : vector<1x256xf32> to vector<8x256xf32>
    %15 = arith.mulf %13, %14 : vector<8x256xf32>
    %16 = vector.broadcast %12 : vector<1x256xf32> to vector<8x256xf32>
    %17 = arith.addf %15, %16 : vector<8x256xf32>
    %18 = math.sin %17 : vector<8x256xf32>
    %c0_3 = arith.constant 0 : index
    %c0_4 = arith.constant 0 : index
    %19 = vector.load %arg2[%c0_3, %c0_4] : memref<8x256xf32, #tpu.memory_space<vmem>>, vector<8x256xf32>
    tpu.vector_store %arg2[%c0_3, %c0_4], %18 {strides = array<i32>} : memref<8x256xf32, #tpu.memory_space<vmem>>, vector<8x256xf32>,
    return
  }
  func.func @transform_0(%arg0: i32) -> (i32, i32) {
    %c0_i32 = arith.constant 0 : i32
    %c0_i32_0 = arith.constant 0 : i32
    %c0_i32_1 = arith.constant 0 : i32
    return %c0_i32, %c0_i32_0 : i32, i32
  }
  func.func @transform_1(%arg0: i32) -> (i32, i32) {
    %c0_i32 = arith.constant 0 : i32
    %c0_i32_0 = arith.constant 0 : i32
    %c0_i32_1 = arith.constant 0 : i32
    return %c0_i32, %c0_i32_0 : i32, i32
  }
}

</mosaic_0001>

<llo_original>
// kernel: tpu_custom_call.1
$region0: #{tpu_custom_call.1}
  #allocation0 [shape = 'u32[]', space=smem, size = 0x4, offset = 0x4, fixed_abs, tag = 'smem constant byte address 0x4 - core index']
  #allocation1 [shape = 'u32[144,128]{1,0:T(1,128)}', space=vmem, size = 0x12000, scoped, tag = 'internal scratch']
  %s0 = inlined_call_operand.vmem [shape: f32[8,1], index: 0, kind: input, shape index: {}]
  %s1 = inlined_call_operand.hbm [shape: f32[8,256], index: 1, kind: output, shape index: {}]
  %s2 = sld [smem:[#allocation0]]
  $region14: #{tpu_custom_call.1} parent=0
    _
  %s4 = ssub.s32 1, %s2
  %s5 = scalar_select 0, %s4, %s2
  $region1: #{tpu_custom_call.1} parent=0
    #allocation2 [shape = 'u8[8192]{0}', space=vmem, size = 0x2000, scoped, tag = 'output window, operand 0, single buffered']
    #allocation3 [shape = 's32[1]{0}', space=sflag, size = 0x4, scoped, tag = 'scoped memory for tpu_custom_call.1']
    %6 = vsyncpa [#allocation3], 0
    // Predicated region
    $region2: #{tpu_custom_call.1} parent=1 // pred_check
      _
    $region3: #{tpu_custom_call.1} parent=1 // pred_check_branch
      %8 = sbr.rel (0) target = $region5
    $region4: #{tpu_custom_call.1} parent=1 // pred_region
      _
    $region5: #{tpu_custom_call.1} parent=1 // pred_fallthru
      _
    %v9 = vld [vmem:[%s0] sm:$0xff]
    %v10 = vlaneseq
    %v11 = vand.u32 %v10, 127
    %v12 = vadd.s32 %v11, 128
    %v13 = vshra.s32 %v11, 1
    %v14 = vshra.s32 %v12, 1
    %v15 = vcvt.s32.f32 %v13
    %v16 = vcvt.s32.f32 %v14
    %v17 = vmul.f32 %v15, -0.072522365
    %v18 = vmul.f32 %v16, -0.072522365
    %v19 = vmul.f32 %v17, 1.442695
    %v20 = vpow.pop %v19
    %v21 = vmul.f32 %v18, 1.442695
    %v22 = vpow.pop %v21
    %v23 = vand.u32 %v11, 1
    %v24 = vand.u32 %v12, 1
    %v25 = vcvt.s32.f32 %v23
    %v26 = vcvt.s32.f32 %v24
    %v27 = vmul.f32 %v25, 1.5707964
    %v28 = vmul.f32 %v26, 1.5707964
    %30 = vset.pattern.permute.xlu0 0
    %31 = vperm.xlu0 %30, %v9
    %v32 = vpop.permute.xlu0 %31
    %v34 = vmul.f32 %v32, %v20
    %v35 = vmul.f32 %v32, %v22
    %v36 = vadd.f32 %v34, %v27
    %v37 = vadd.f32 %v35, %v28
    %v38 = vand.u32 2147483647, %v36
    %vm39 = vcmp.le.f32.partialorder %v38, 0.7853982
    %vm40 = vcmp.lt.s32.totalorder %v36, 0
    %v41 = vand.u32 %v36, 2139095040
    %v42 = vshrl.u32 %v41, 23
    %v43 = vsub.s32 %v42, 127
    %v44 = vand.u32 2147483647, %v36
    %v45 = vand.u32 %v44, 8388607
    %v46 = vor.u32 %v45, 8388608
    %v47 = vsub.s32 0, %v46
    %v48 = vadd.s32 %v43, 1
    %vm49 = vcmp.gt.s32.totalorder %v48, 0
    %v50 = vsel %vm49, %v48, 0
    %v51 = vshrl.u32 %v50, 5
    %v52 = vand.u32 %v50, 31
    %v53 = vsub.s32 32, %v52
    %v54 = vshrl.u32 683565275, %v53
    %v55 = vshll.u32 683565275, %v52
    %v56 = vshrl.u32 2475754826, %v53
    %v57 = vor.u32 %v55, %v56
    %v58 = vshll.u32 2475754826, %v52
    %v59 = vshrl.u32 2131351028, %v53
    %v60 = vor.u32 %v58, %v59
    %v61 = vshll.u32 2131351028, %v52
    %v62 = vshrl.u32 2102212464, %v53
    %v63 = vor.u32 %v61, %v62
    %v64 = vshll.u32 2102212464, %v52
    %v65 = vshrl.u32 920167782, %v53
    %v66 = vor.u32 %v64, %v65
    %v67 = vshll.u32 920167782, %v52
    %v68 = vshrl.u32 1326507024, %v53
    %v69 = vor.u32 %v67, %v68
    %vm70 = vcmp.lt.s32.totalorder %v51, 1
    %vm71 = vcmp.lt.s32.totalorder %v51, 2
    %vm72 = vcmp.lt.s32.totalorder %v51, 3
    %vm73 = vcmp.lt.s32.totalorder %v51, 4
    %v74 = vsel %vm70, %v54, %v57
    %v75 = vsel %vm73, %v63, 2102212464
    %v76 = vsel %vm72, %v60, %v75
    %v77 = vsel %vm71, %v74, %v76
    %v78 = vsel %vm70, %v57, %v60
    %v79 = vsel %vm73, %v66, 920167782
    %v80 = vsel %vm72, %v63, %v79
    %v81 = vsel %vm71, %v78, %v80
    %v82 = vsel %vm70, %v60, %v63
    %v83 = vsel %vm73, %v69, 1326507024
    %v84 = vsel %vm72, %v66, %v83
    %v85 = vsel %vm71, %v82, %v84
    %v86 = vshll.u32 %v46, 8
    %v87 = vmul.u32.u64.compose %v86, %v85
    %v88 = vextract.low.u32 %v87
    %v89 = vextract.high.u32 %v87
    %v90 = vmul.u32.u64.compose %v86, %v81
    %v91 = vextract.low.u32 %v90
    %v92 = vextract.high.u32 %v90
    %v93 = vmul.u32 %v86, %v77
    %v94 = vadd.s32 %v89, %v91
    %vm95 = vc.u32 %v89, %v91
    %v96 = vadd.s32 %v92, 1
    %v97 = vsel %vm95, %v96, %v92
    %v98 = vadd.s32 %v93, %v97
    %v99 = vadd.s32 %v98, 536870912
    %v100 = vshrl.u32 %v99, 30
    %v101 = vshll.u32 %v100, 30
    %v102 = vsub.s32 %v98, %v101
    %vm103 = vcmp.lt.s32.totalorder %v102, 0
    %v104 = vsub.s32 0, %v102
    %v105 = vsel %vm103, %v104, %v102
    %v106 = vclz %v105
    %v107 = vsub.s32 %v106, 2
    %vm108 = vcmp.gt.s32.totalorder 0, %v107
    %v109 = vsel %vm108, 0, %v107
    %v110 = vsub.s32 32, %v109
    %v111 = vshll.u32 %v102, %v109
    %v112 = vshrl.u32 %v94, %v110
    %v113 = vor.u32 %v111, %v112
    %v114 = vsub.s32 4294967266, %v109
    %v115 = vadd.s32 %v114, 127
    %v116 = vshll.u32 %v115, 23
    %v117 = vor.u32 4788187, %v116
    %v118 = vand.u32 2147483647, %v117
    %v120 = vcvt.s32.f32 %v113
    %v121 = vmul.f32 %v120, %v118
    %v122 = vxor.u32 %v121, 2147483648
    %v123 = vsel %vm40, %v122, %v121
    %v124 = vsub.s32 4, %v100
    %v125 = vsel %vm40, %v124, %v100
    %v126 = vsel %vm39, %v36, %v123
    %v127 = vsel %vm39, 0, %v125
    %v128 = vcosq.f32.pop %v126
    %v129 = vsinq.f32.pop %v126
    %vm130 = vweird.f32 %v36
    %v131 = vadd.s32 %v127, 3
    %v132 = vand.u32 %v131, 3
    %vm133 = vcmp.lt.s32.totalorder %v132, 2
    %vm134 = vcmp.eq.s32.totalorder %v132, 0
    %v135 = vxor.u32 %v129, 2147483648
    %v136 = vsel %vm134, %v128, %v135
    %vm137 = vcmp.eq.s32.totalorder %v132, 2
    %v138 = vxor.u32 %v128, 2147483648
    %v139 = vsel %vm137, %v138, %v129
    %v140 = vsel %vm133, %v136, %v139
    %v141 = vsel %vm130, nan, %v140
    %v142 = vand.u32 2147483647, %v37
    %vm143 = vcmp.le.f32.partialorder %v142, 0.7853982
    %vm144 = vcmp.lt.s32.totalorder %v37, 0
    %v145 = vand.u32 %v37, 2139095040
    %v146 = vshrl.u32 %v145, 23
    %v147 = vsub.s32 %v146, 127
    %v148 = vand.u32 2147483647, %v37
    %v149 = vand.u32 %v148, 8388607
    %v150 = vor.u32 %v149, 8388608
    %v151 = vsub.s32 0, %v150
    %v152 = vadd.s32 %v147, 1
    %vm153 = vcmp.gt.s32.totalorder %v152, 0
    %v154 = vsel %vm153, %v152, 0
    %v155 = vshrl.u32 %v154, 5
    %v156 = vand.u32 %v154, 31
    %v157 = vsub.s32 32, %v156
    %v158 = vshrl.u32 683565275, %v157
    %v159 = vshll.u32 683565275, %v156
    %v160 = vshrl.u32 2475754826, %v157
    %v161 = vor.u32 %v159, %v160
    %v162 = vshll.u32 2475754826, %v156
    %v163 = vshrl.u32 2131351028, %v157
    %v164 = vor.u32 %v162, %v163
    %v165 = vshll.u32 2131351028, %v156
    %v166 = vshrl.u32 2102212464, %v157
    %v167 = vor.u32 %v165, %v166
    %v168 = vshll.u32 2102212464, %v156
    %v169 = vshrl.u32 920167782, %v157
    %v170 = vor.u32 %v168, %v169
    %v171 = vshll.u32 920167782, %v156
    %v172 = vshrl.u32 1326507024, %v157
    %v173 = vor.u32 %v171, %v172
    %vm174 = vcmp.lt.s32.totalorder %v155, 1
    %vm175 = vcmp.lt.s32.totalorder %v155, 2
    %vm176 = vcmp.lt.s32.totalorder %v155, 3
    %vm177 = vcmp.lt.s32.totalorder %v155, 4
    %v178 = vsel %vm174, %v158, %v161
    %v179 = vsel %vm177, %v167, 2102212464
    %v180 = vsel %vm176, %v164, %v179
    %v181 = vsel %vm175, %v178, %v180
    %v182 = vsel %vm174, %v161, %v164
    %v183 = vsel %vm177, %v170, 920167782
    %v184 = vsel %vm176, %v167, %v183
    %v185 = vsel %vm175, %v182, %v184
    %v186 = vsel %vm174, %v164, %v167
    %v187 = vsel %vm177, %v173, 1326507024
    %v188 = vsel %vm176, %v170, %v187
    %v189 = vsel %vm175, %v186, %v188
    %v190 = vshll.u32 %v150, 8
    %v191 = vmul.u32.u64.compose %v190, %v189
    %v192 = vextract.low.u32 %v191
    %v193 = vextract.high.u32 %v191
    %v194 = vmul.u32.u64.compose %v190, %v185
    %v195 = vextract.low.u32 %v194
    %v196 = vextract.high.u32 %v194
    %v197 = vmul.u32 %v190, %v181
    %v198 = vadd.s32 %v193, %v195
    %vm199 = vc.u32 %v193, %v195
    %v200 = vadd.s32 %v196, 1
    %v201 = vsel %vm199, %v200, %v196
    %v202 = vadd.s32 %v197, %v201
    %v203 = vadd.s32 %v202, 536870912
    %v204 = vshrl.u32 %v203, 30
    %v205 = vshll.u32 %v204, 30
    %v206 = vsub.s32 %v202, %v205
    %vm207 = vcmp.lt.s32.totalorder %v206, 0
    %v208 = vsub.s32 0, %v206
    %v209 = vsel %vm207, %v208, %v206
    %v210 = vclz %v209
    %v211 = vsub.s32 %v210, 2
    %vm212 = vcmp.gt.s32.totalorder 0, %v211
    %v213 = vsel %vm212, 0, %v211
    %v214 = vsub.s32 32, %v213
    %v215 = vshll.u32 %v206, %v213
    %v216 = vshrl.u32 %v198, %v214
    %v217 = vor.u32 %v215, %v216
    %v218 = vsub.s32 4294967266, %v213
    %v219 = vadd.s32 %v218, 127
    %v220 = vshll.u32 %v219, 23
    %v221 = vor.u32 4788187, %v220
    %v222 = vand.u32 2147483647, %v221
    %v224 = vcvt.s32.f32 %v217
    %v225 = vmul.f32 %v224, %v222
    %v226 = vxor.u32 %v225, 2147483648
    %v227 = vsel %vm144, %v226, %v225
    %v228 = vsub.s32 4, %v204
    %v229 = vsel %vm144, %v228, %v204
    %v230 = vsel %vm143, %v37, %v227
    %v231 = vsel %vm143, 0, %v229
    %v232 = vcosq.f32.pop %v230
    %v233 = vsinq.f32.pop %v230
    %vm234 = vweird.f32 %v37
    %v235 = vadd.s32 %v231, 3
    %v236 = vand.u32 %v235, 3
    %vm237 = vcmp.lt.s32.totalorder %v236, 2
    %vm238 = vcmp.eq.s32.totalorder %v236, 0
    %v239 = vxor.u32 %v233, 2147483648
    %v240 = vsel %vm238, %v232, %v239
    %vm241 = vcmp.eq.s32.totalorder %v236, 2
    %v242 = vxor.u32 %v232, 2147483648
    %v243 = vsel %vm241, %v242, %v233
    %v244 = vsel %vm237, %v240, %v243
    %v245 = vsel %vm234, nan, %v244
    %246 = vst [vmem:[#allocation2] sm:$0xff] %v141
    %247 = vst [vmem:[#allocation2 + $0x8] sm:$0xff] %v245
    // Predicated region
    $region6: #{tpu_custom_call.1} parent=1 // pred_check
      _
    $region7: #{tpu_custom_call.1} parent=1 // pred_check_branch
      %249 = sbr.rel (0) target = $region9
    $region8: #{tpu_custom_call.1} parent=1 // pred_region
      %s251 = ssub.s32 256, 256
      %252 = vsyncadd [#allocation3], %s251
      %s254 = sshll.u32 [#allocation2], 4
      %s255 = int_to_ptr.vmem [resolvable:$true] %s254
      %257 = dma.vmem_to_hbm [thread:$0]  %s255, 256, %s1, [#allocation3]
    $region9: #{tpu_custom_call.1} parent=1 // pred_fallthru
      _
    // Predicated region
    $region10: #{tpu_custom_call.1} parent=1 // pred_check
      _
    $region11: #{tpu_custom_call.1} parent=1 // pred_check_branch
      %259 = sbr.rel (0) target = $region13
    $region12: #{tpu_custom_call.1} parent=1 // pred_region
      %260 = dma.done [#allocation3], 256
    $region13: #{tpu_custom_call.1} parent=1 // pred_fallthru
      _
    %261 = vsyncpa [#allocation3], 1

</llo_original>
